<compile_context>
chip_gen: v6e
topology: v6e:2x2x1
jax: 0.10.0
libtpu: 0.0.40
codegen_flags: <defaults>
</compile_context>

<pallas_src>
import jax
import jax.numpy as jnp
from jax import lax
from jax.experimental import pallas as pl
from jax.experimental.pallas import tpu as pltpu

_SQRT2 = 1.4142135623730951


def _gelu_exact(x):
    # torch.nn.GELU() default is the exact erf formulation.
    return 0.5 * x * (1.0 + lax.erf(x / _SQRT2))


def adapter_kernel(x_ref, wd_ref, bd_ref, wu_ref, bu_ref, o_ref):
    x = x_ref[...]                                              # (tm, Hp), native dtype
    # down projection on the MXU, f32 accumulation
    h = jnp.dot(x, wd_ref[...], preferred_element_type=jnp.float32)
    h = h + bd_ref[...].astype(jnp.float32)
    # GELU (exact, erf-based) in f32
    h = _gelu_exact(h)
    # up projection; feed the MXU in the weight dtype (bf16 path when weights are bf16)
    y = jnp.dot(h.astype(wu_ref.dtype), wu_ref[...],
                preferred_element_type=jnp.float32)
    y = y + bu_ref[...].astype(jnp.float32)
    # residual add: f32 for f32 activations; native bf16 add for bf16 activations
    if x.dtype == jnp.float32:
        o_ref[...] = (x + y).astype(o_ref.dtype)
    else:
        o_ref[...] = (x + y.astype(x.dtype)).astype(o_ref.dtype)


def _round_up(x, m):
    return ((x + m - 1) // m) * m


def _vmem_capacity_bytes():
    try:
        return int(pltpu.get_tpu_info().vmem_capacity_bytes)
    except Exception:
        return 64 * 1024 * 1024        # conservative (v7x per-TC VMEM)


def _choose_tm(n_rows, h_pad, hb_pad, act_bytes, w_bytes, budget_bytes, multi_core):
    """Largest row tile whose pipeline buffers + resident weights fit the budget."""
    # Resident weights + biases, single-buffered (constant index_map -> Buffered(1)).
    weights = (h_pad * hb_pad + hb_pad * h_pad + hb_pad + h_pad) * w_bytes
    # TODO(synk): for very large adapters whose weights alone exceed the budget,
    # add a 2-D (rows x column-tiles) grid with a K-tiled up-projection instead
    # of relying on spills.
    candidates = [1024, 512, 384, 256, 128, 64, 32, 16, 8]
    if h_pad <= 512:
        candidates = [4096, 2048] + candidates

    tm = 8
    for cand in candidates:
        io = 2 * cand * h_pad * act_bytes * 2                 # x + out tiles, double-buffered
        scratch = 2 * cand * hb_pad * 4 + 2 * cand * h_pad * 4  # h/GELU + y/add f32 temps
        if weights + io + scratch <= budget_bytes:
            tm = cand
            break

    # Never tile beyond the row count: a single full-extent block is always valid.
    if tm >= n_rows:
        tm = n_rows
    # Only multi-TensorCore parts benefit from splitting a single step in two.
    if multi_core:
        while tm > 256 and pl.cdiv(n_rows, tm) < 2:
            tm = _round_up(pl.cdiv(tm, 2), 8)
    return tm


def adapter_forward(x, w_down, b_down, w_up, b_up):
    """x: (batch, seq, hidden). Weights stored (in, out) so the kernel does x @ W + b."""
    B, S, H = x.shape
    Hb = w_down.shape[1]
    assert w_down.shape == (H, Hb) and w_up.shape == (Hb, H)

    act_dtype = x.dtype
    act_bytes = jnp.dtype(x.dtype).itemsize
    w_bytes = jnp.dtype(w_down.dtype).itemsize

    # Lane-dense padding only when needed (H % 128 == 0 is the common case -> no copy).
    Hp = _round_up(H, 128)
    Hbp = _round_up(Hb, 128)
    N = B * S

    vmem_cap = _vmem_capacity_bytes()
    vmem_budget = (vmem_cap * 3) // 4          # ~96 MiB on 128 MiB parts, ~48 MiB on v7x
    vmem_limit = (vmem_cap * 7) // 8           # explicit scoped limit
    multi_core = vmem_cap < 100 * 1024 * 1024  # v7x-like: 64 MiB/TC, 2 TensorCores

    tm = _choose_tm(N, Hp, Hbp, act_bytes, w_bytes, vmem_budget, multi_core)

    x2 = x.reshape(N, H)                       # pure reshape; no row padding
    if Hp != H:
        x2 = jnp.pad(x2, ((0, 0), (0, Hp - H)))     # exact: padded cols/rows are zero
    wd = w_down if (Hp == H and Hbp == Hb) else jnp.pad(
        w_down, ((0, Hp - H), (0, Hbp - Hb)))
    bd = (b_down if Hbp == Hb else jnp.pad(b_down, (0, Hbp - Hb))).reshape(1, Hbp)
    wu = w_up if (Hp == H and Hbp == Hb) else jnp.pad(
        w_up, ((0, Hbp - Hb), (0, Hp - H)))
    bu = (b_up if Hp == H else jnp.pad(b_up, (0, Hp - H))).reshape(1, Hp)

    def run(single_buffer_weights):
        wkw = dict(pipeline_mode=pl.Buffered(1)) if single_buffer_weights else {}
        return pl.pallas_call(
            adapter_kernel,
            out_shape=jax.ShapeDtypeStruct((N, Hp), act_dtype),
            grid_spec=pltpu.PrefetchScalarGridSpec(
                num_scalar_prefetch=0,
                grid=(pl.cdiv(N, tm),),
                in_specs=[
                    pl.BlockSpec((tm, Hp), lambda i: (i, 0)),            # x rows
                    pl.BlockSpec((Hp, Hbp), lambda i: (0, 0), **wkw),    # W_down (resident)
                    pl.BlockSpec((1, Hbp), lambda i: (0, 0), **wkw),     # b_down
                    pl.BlockSpec((Hbp, Hp), lambda i: (0, 0), **wkw),    # W_up (resident)
                    pl.BlockSpec((1, Hp), lambda i: (0, 0), **wkw),      # b_up
                ],
                out_specs=pl.BlockSpec((tm, Hp), lambda i: (i, 0)),
            ),
            compiler_params=pltpu.CompilerParams(
                dimension_semantics=("parallel",),
                vmem_limit_bytes=vmem_limit),
        )(x2, wd, bd, wu, bu)

    try:
        out = run(True)
    except Exception:
        # Fallback for JAX versions / configs that reject single-buffered BlockSpecs.
        out = run(False)

    if Hp != H:
        out = out[:, :H]
    return out.reshape(B, S, H)


def adapter_reference(x, w_down, b_down, w_up, b_up):
    h = x @ w_down + b_down
    h = _gelu_exact(h)
    y = h @ w_up + b_up
    return x + y


def _run_case(key, batch, seq, hidden, red, atol=2e-5, rtol=2e-5):
    bottleneck = max(hidden // red, 1)
    kx, kwd, kbd, kwu, kbu = jax.random.split(key, 5)
    x = jax.random.normal(kx, (batch, seq, hidden), dtype=jnp.float32)
    w_down = jax.random.normal(kwd, (hidden, bottleneck), dtype=jnp.float32) * 0.02
    b_down = jax.random.normal(kbd, (bottleneck,), dtype=jnp.float32) * 0.02
    w_up = jax.random.normal(kwu, (bottleneck, hidden), dtype=jnp.float32) * 0.02
    b_up = jax.random.normal(kbu, (hidden,), dtype=jnp.float32) * 0.02

    out = adapter_forward(x, w_down, b_down, w_up, b_up)
    out = jax.block_until_ready(out)
    ref = adapter_reference(x, w_down, b_down, w_up, b_up)
    assert out.shape == x.shape
    err = jnp.max(jnp.abs(out - ref))
    assert jnp.allclose(out, ref, atol=atol, rtol=rtol), \
        f"mismatch vs reference ({batch},{seq},{hidden}); max abs err={err}"


if __name__ == "__main__":
    key = jax.random.PRNGKey(0)
    k1, k2, k3 = jax.random.split(key, 3)

    # Small shape matching the module spec: input_dim=32, reduction_factor=16 -> bottleneck=2.
    _run_case(k1, batch=2, seq=8, hidden=32, red=16)

    # Non-aligned shape exercising the lane-padding + partial/full-extent row block path.
    _run_case(k2, batch=3, seq=100, hidden=160, red=16)

    # 128-aligned hidden: no activation pad / slice in the wrapper (pure reshape path).
    _run_case(k3, batch=2, seq=64, hidden=256, red=16)

    print("KERNEL_OK")
</pallas_src>

<mosaic_0001>
module attributes {stable_mosaic.version = 11 : i64} {
  func.func @adapter_kernel(%arg0: i32, %arg1: memref<16x128xf32, #tpu.memory_space<vmem>>, %arg2: memref<128x128xf32, #tpu.memory_space<vmem>>, %arg3: memref<1x128xf32, #tpu.memory_space<vmem>>, %arg4: memref<128x128xf32, #tpu.memory_space<vmem>>, %arg5: memref<1x128xf32, #tpu.memory_space<vmem>>, %arg6: memref<16x128xf32, #tpu.memory_space<vmem>>) attributes {dimension_semantics = [#tpu.dimension_semantics<parallel>], iteration_bounds = array<i64: 1>, scalar_prefetch = 0 : i64, scratch_operands = 0 : i64, tpu.core_type = #tpu.core_type<tc>, window_params = [{transform_indices = @transform_0, window_bounds = array<i64: 16, 128>}, {pipeline_mode = #tpu.pipeline_mode<synchronous>, transform_indices = @transform_1, window_bounds = array<i64: 128, 128>}, {pipeline_mode = #tpu.pipeline_mode<synchronous>, transform_indices = @transform_2, window_bounds = array<i64: 1, 128>}, {pipeline_mode = #tpu.pipeline_mode<synchronous>, transform_indices = @transform_3, window_bounds = array<i64: 128, 128>}, {pipeline_mode = #tpu.pipeline_mode<synchronous>, transform_indices = @transform_4, window_bounds = array<i64: 1, 128>}, {transform_indices = @transform_5, window_bounds = array<i64: 16, 128>}]} {
    %c0 = arith.constant 0 : index
    %c0_0 = arith.constant 0 : index
    %0 = vector.load %arg1[%c0, %c0_0] : memref<16x128xf32, #tpu.memory_space<vmem>>, vector<16x128xf32>
    %c0_1 = arith.constant 0 : index
    %c0_2 = arith.constant 0 : index
    %1 = vector.load %arg2[%c0_1, %c0_2] : memref<128x128xf32, #tpu.memory_space<vmem>>, vector<128x128xf32>
    %cst = arith.constant dense<0.000000e+00> : vector<16x128xf32>
    %2 = tpu.matmul %0, %1, %cst {dimension_numbers = #tpu.dot_dimension_numbers<[1], [0], [0], [1], [0, 0, 1, 1], [], []>} : vector<16x128xf32>, vector<128x128xf32>, vector<16x128xf32> -> vector<16x128xf32>
    %c0_3 = arith.constant 0 : index
    %c0_4 = arith.constant 0 : index
    %3 = vector.load %arg3[%c0_3, %c0_4] : memref<1x128xf32, #tpu.memory_space<vmem>>, vector<1x128xf32>
    %4 = vector.broadcast %3 : vector<1x128xf32> to vector<16x128xf32>
    %5 = arith.addf %2, %4 : vector<16x128xf32>
    %cst_5 = arith.constant 5.000000e-01 : f32
    %6 = vector.broadcast %cst_5 : f32 to vector<16x128xf32>
    %7 = arith.mulf %6, %5 : vector<16x128xf32>
    %cst_6 = arith.constant 1.41421354 : f32
    %8 = vector.broadcast %cst_6 : f32 to vector<16x128xf32>
    %9 = arith.divf %5, %8 : vector<16x128xf32>
    %10 = math.erf %9 : vector<16x128xf32>
    %cst_7 = arith.constant 1.000000e+00 : f32
    %11 = vector.broadcast %cst_7 : f32 to vector<16x128xf32>
    %12 = arith.addf %11, %10 : vector<16x128xf32>
    %13 = arith.mulf %7, %12 : vector<16x128xf32>
    %c0_8 = arith.constant 0 : index
    %c0_9 = arith.constant 0 : index
    %14 = vector.load %arg4[%c0_8, %c0_9] : memref<128x128xf32, #tpu.memory_space<vmem>>, vector<128x128xf32>
    %cst_10 = arith.constant dense<0.000000e+00> : vector<16x128xf32>
    %15 = tpu.matmul %13, %14, %cst_10 {dimension_numbers = #tpu.dot_dimension_numbers<[1], [0], [0], [1], [0, 0, 1, 1], [], []>} : vector<16x128xf32>, vector<128x128xf32>, vector<16x128xf32> -> vector<16x128xf32>
    %c0_11 = arith.constant 0 : index
    %c0_12 = arith.constant 0 : index
    %16 = vector.load %arg5[%c0_11, %c0_12] : memref<1x128xf32, #tpu.memory_space<vmem>>, vector<1x128xf32>
    %17 = vector.broadcast %16 : vector<1x128xf32> to vector<16x128xf32>
    %18 = arith.addf %15, %17 : vector<16x128xf32>
    %19 = arith.addf %0, %18 : vector<16x128xf32>
    %c0_13 = arith.constant 0 : index
    %c0_14 = arith.constant 0 : index
    %20 = vector.load %arg6[%c0_13, %c0_14] : memref<16x128xf32, #tpu.memory_space<vmem>>, vector<16x128xf32>
    tpu.vector_store %arg6[%c0_13, %c0_14], %19 {strides = array<i32>} : memref<16x128xf32, #tpu.memory_space<vmem>>, vector<16x128xf32>,
    return
  }
  func.func @transform_0(%arg0: i32) -> (i32, i32) {
    %c0_i32 = arith.constant 0 : i32
    %c0_i32_0 = arith.constant 0 : i32
    return %arg0, %c0_i32 : i32, i32
  }
  func.func @transform_1(%arg0: i32) -> (i32, i32) {
    %c0_i32 = arith.constant 0 : i32
    %c0_i32_0 = arith.constant 0 : i32
    %c0_i32_1 = arith.constant 0 : i32
    return %c0_i32, %c0_i32_0 : i32, i32
  }
  func.func @transform_2(%arg0: i32) -> (i32, i32) {
    %c0_i32 = arith.constant 0 : i32
    %c0_i32_0 = arith.constant 0 : i32
    %c0_i32_1 = arith.constant 0 : i32
    return %c0_i32, %c0_i32_0 : i32, i32
  }
  func.func @transform_3(%arg0: i32) -> (i32, i32) {
    %c0_i32 = arith.constant 0 : i32
    %c0_i32_0 = arith.constant 0 : i32
    %c0_i32_1 = arith.constant 0 : i32
    return %c0_i32, %c0_i32_0 : i32, i32
  }
  func.func @transform_4(%arg0: i32) -> (i32, i32) {
    %c0_i32 = arith.constant 0 : i32
    %c0_i32_0 = arith.constant 0 : i32
    %c0_i32_1 = arith.constant 0 : i32
    return %c0_i32, %c0_i32_0 : i32, i32
  }
  func.func @transform_5(%arg0: i32) -> (i32, i32) {
    %c0_i32 = arith.constant 0 : i32
    %c0_i32_0 = arith.constant 0 : i32
    return %arg0, %c0_i32 : i32, i32
  }
}

module attributes {stable_mosaic.version = 11 : i64} {
  func.func @adapter_kernel(%arg0: i32, %arg1: memref<16x128xf32, #tpu.memory_space<vmem>>, %arg2: memref<128x128xf32, #tpu.memory_space<vmem>>, %arg3: memref<1x128xf32, #tpu.memory_space<vmem>>, %arg4: memref<128x128xf32, #tpu.memory_space<vmem>>, %arg5: memref<1x128xf32, #tpu.memory_space<vmem>>, %arg6: memref<16x128xf32, #tpu.memory_space<vmem>>) attributes {dimension_semantics = [#tpu.dimension_semantics<parallel>], iteration_bounds = array<i64: 1>, scalar_prefetch = 0 : i64, scratch_operands = 0 : i64, tpu.core_type = #tpu.core_type<tc>, window_params = [{transform_indices = @transform_0, window_bounds = array<i64: 16, 128>}, {pipeline_mode = #tpu.pipeline_mode<synchronous>, transform_indices = @transform_1, window_bounds = array<i64: 128, 128>}, {pipeline_mode = #tpu.pipeline_mode<synchronous>, transform_indices = @transform_2, window_bounds = array<i64: 1, 128>}, {pipeline_mode = #tpu.pipeline_mode<synchronous>, transform_indices = @transform_3, window_bounds = array<i64: 128, 128>}, {pipeline_mode = #tpu.pipeline_mode<synchronous>, transform_indices = @transform_4, window_bounds = array<i64: 1, 128>}, {transform_indices = @transform_5, window_bounds = array<i64: 16, 128>}]} {
    %c0 = arith.constant 0 : index
    %c0_0 = arith.constant 0 : index
    %0 = vector.load %arg1[%c0, %c0_0] : memref<16x128xf32, #tpu.memory_space<vmem>>, vector<16x128xf32>
    %c0_1 = arith.constant 0 : index
    %c0_2 = arith.constant 0 : index
    %1 = vector.load %arg2[%c0_1, %c0_2] : memref<128x128xf32, #tpu.memory_space<vmem>>, vector<128x128xf32>
    %cst = arith.constant dense<0.000000e+00> : vector<16x128xf32>
    %2 = tpu.matmul %0, %1, %cst {dimension_numbers = #tpu.dot_dimension_numbers<[1], [0], [0], [1], [0, 0, 1, 1], [], []>} : vector<16x128xf32>, vector<128x128xf32>, vector<16x128xf32> -> vector<16x128xf32>
    %c0_3 = arith.constant 0 : index
    %c0_4 = arith.constant 0 : index
    %3 = vector.load %arg3[%c0_3, %c0_4] : memref<1x128xf32, #tpu.memory_space<vmem>>, vector<1x128xf32>
    %4 = vector.broadcast %3 : vector<1x128xf32> to vector<16x128xf32>
    %5 = arith.addf %2, %4 : vector<16x128xf32>
    %cst_5 = arith.constant 5.000000e-01 : f32
    %6 = vector.broadcast %cst_5 : f32 to vector<16x128xf32>
    %7 = arith.mulf %6, %5 : vector<16x128xf32>
    %cst_6 = arith.constant 1.41421354 : f32
    %8 = vector.broadcast %cst_6 : f32 to vector<16x128xf32>
    %9 = arith.divf %5, %8 : vector<16x128xf32>
    %10 = math.erf %9 : vector<16x128xf32>
    %cst_7 = arith.constant 1.000000e+00 : f32
    %11 = vector.broadcast %cst_7 : f32 to vector<16x128xf32>
    %12 = arith.addf %11, %10 : vector<16x128xf32>
    %13 = arith.mulf %7, %12 : vector<16x128xf32>
    %c0_8 = arith.constant 0 : index
    %c0_9 = arith.constant 0 : index
    %14 = vector.load %arg4[%c0_8, %c0_9] : memref<128x128xf32, #tpu.memory_space<vmem>>, vector<128x128xf32>
    %cst_10 = arith.constant dense<0.000000e+00> : vector<16x128xf32>
    %15 = tpu.matmul %13, %14, %cst_10 {dimension_numbers = #tpu.dot_dimension_numbers<[1], [0], [0], [1], [0, 0, 1, 1], [], []>} : vector<16x128xf32>, vector<128x128xf32>, vector<16x128xf32> -> vector<16x128xf32>
    %c0_11 = arith.constant 0 : index
    %c0_12 = arith.constant 0 : index
    %16 = vector.load %arg5[%c0_11, %c0_12] : memref<1x128xf32, #tpu.memory_space<vmem>>, vector<1x128xf32>
    %17 = vector.broadcast %16 : vector<1x128xf32> to vector<16x128xf32>
    %18 = arith.addf %15, %17 : vector<16x128xf32>
    %19 = arith.addf %0, %18 : vector<16x128xf32>
    %c0_13 = arith.constant 0 : index
    %c0_14 = arith.constant 0 : index
    %20 = vector.load %arg6[%c0_13, %c0_14] : memref<16x128xf32, #tpu.memory_space<vmem>>, vector<16x128xf32>
    tpu.vector_store %arg6[%c0_13, %c0_14], %19 {strides = array<i32>} : memref<16x128xf32, #tpu.memory_space<vmem>>, vector<16x128xf32>,
    return
  }
  func.func @transform_0(%arg0: i32) -> (i32, i32) {
    %c0_i32 = arith.constant 0 : i32
    %c0_i32_0 = arith.constant 0 : i32
    return %arg0, %c0_i32 : i32, i32
  }
  func.func @transform_1(%arg0: i32) -> (i32, i32) {
    %c0_i32 = arith.constant 0 : i32
    %c0_i32_0 = arith.constant 0 : i32
    %c0_i32_1 = arith.constant 0 : i32
    return %c0_i32, %c0_i32_0 : i32, i32
  }
  func.func @transform_2(%arg0: i32) -> (i32, i32) {
    %c0_i32 = arith.constant 0 : i32
    %c0_i32_0 = arith.constant 0 : i32
    %c0_i32_1 = arith.constant 0 : i32
    return %c0_i32, %c0_i32_0 : i32, i32
  }
  func.func @transform_3(%arg0: i32) -> (i32, i32) {
    %c0_i32 = arith.constant 0 : i32
    %c0_i32_0 = arith.constant 0 : i32
    %c0_i32_1 = arith.constant 0 : i32
    return %c0_i32, %c0_i32_0 : i32, i32
  }
  func.func @transform_4(%arg0: i32) -> (i32, i32) {
    %c0_i32 = arith.constant 0 : i32
    %c0_i32_0 = arith.constant 0 : i32
    %c0_i32_1 = arith.constant 0 : i32
    return %c0_i32, %c0_i32_0 : i32, i32
  }
  func.func @transform_5(%arg0: i32) -> (i32, i32) {
    %c0_i32 = arith.constant 0 : i32
    %c0_i32_0 = arith.constant 0 : i32
    return %arg0, %c0_i32 : i32, i32
  }
}

</mosaic_0001>

<llo_original>
// kernel: tpu_custom_call.1
$region0: #{tpu_custom_call.1}
  #allocation0 [shape = 'u32[]', space=smem, size = 0x4, offset = 0x4, fixed_abs, tag = 'smem constant byte address 0x4 - core index']
  #allocation1 [shape = 'u32[144,128]{1,0:T(1,128)}', space=vmem, size = 0x12000, scoped, tag = 'internal scratch']
  %s0 = inlined_call_operand.hbm [shape: f32[16,128], index: 0, kind: input, shape index: {}]
  %s1 = inlined_call_operand.hbm [shape: f32[128,128], index: 1, kind: input, shape index: {}]
  %s2 = inlined_call_operand.vmem [shape: f32[1,128], index: 2, kind: input, shape index: {}]
  %s3 = inlined_call_operand.hbm [shape: f32[128,128], index: 3, kind: input, shape index: {}]
  %s4 = inlined_call_operand.vmem [shape: f32[1,128], index: 4, kind: input, shape index: {}]
  %s5 = inlined_call_operand.hbm [shape: f32[16,128], index: 5, kind: output, shape index: {}]
  %s6 = sld [smem:[#allocation0]]
  $region42: #{tpu_custom_call.1} parent=0
    _
  %s8 = ssub.s32 1, %s6
  %s9 = scalar_select 0, %s8, %s6
  $region1: #{tpu_custom_call.1} parent=0
    #allocation2 [shape = 'u8[8192]{0}', space=vmem, size = 0x2000, scoped, tag = 'input window, operand 0, single buffered']
    #allocation3 [shape = 's32[1]{0}', space=sflag, size = 0x4, scoped, tag = 'scoped memory for tpu_custom_call.1']
    #allocation4 [shape = 's32[1]{0}', space=sflag, size = 0x4, scoped, tag = 'scoped memory for tpu_custom_call.1']
    #allocation5 [shape = 'u8[65536]{0}', space=vmem, size = 0x10000, scoped, tag = 'input window, operand 1, single buffered']
    #allocation6 [shape = 's32[1]{0}', space=sflag, size = 0x4, scoped, tag = 'scoped memory for tpu_custom_call.1']
    #allocation7 [shape = 'u8[65536]{0}', space=vmem, size = 0x10000, scoped, tag = 'input window, operand 3, single buffered']
    #allocation8 [shape = 'u8[8192]{0}', space=vmem, size = 0x2000, scoped, tag = 'output window, operand 0, single buffered']
    %10 = vsyncpa [#allocation3], 0
    %11 = vsyncpa [#allocation6], 0
    %12 = vsyncpa [#allocation4], 0
    // Predicated region
    $region2: #{tpu_custom_call.1} parent=1 // pred_check
      _
    $region3: #{tpu_custom_call.1} parent=1 // pred_check_branch
      %14 = sbr.rel (0) target = $region5
    $region4: #{tpu_custom_call.1} parent=1 // pred_region
      %s16 = ssub.s32 256, 256
      %17 = vsyncadd [#allocation3], %s16
      %s18 = sshll.u32 [#allocation2], 4
      %s19 = int_to_ptr.vmem [resolvable:$true] %s18
      %24 = dma.hbm_to_vmem [thread:$0]  %s0, 256, %s19, [#allocation3], 128, 128, 8
    $region5: #{tpu_custom_call.1} parent=1 // pred_fallthru
      _
    // Predicated region
    $region6: #{tpu_custom_call.1} parent=1 // pred_check
      _
    $region7: #{tpu_custom_call.1} parent=1 // pred_check_branch
      %26 = sbr.rel (0) target = $region9
    $region8: #{tpu_custom_call.1} parent=1 // pred_region
      %s28 = ssub.s32 2048, 2048
      %29 = vsyncadd [#allocation6], %s28
      %s30 = sshll.u32 [#allocation5], 4
      %s31 = int_to_ptr.vmem [resolvable:$true] %s30
      %36 = dma.hbm_to_vmem [thread:$0]  %s1, 2048, %s31, [#allocation6], 128, 128, 8
    $region9: #{tpu_custom_call.1} parent=1 // pred_fallthru
      _
    // Predicated region
    $region10: #{tpu_custom_call.1} parent=1 // pred_check
      _
    $region11: #{tpu_custom_call.1} parent=1 // pred_check_branch
      %38 = sbr.rel (0) target = $region13
    $region12: #{tpu_custom_call.1} parent=1 // pred_region
      _
    $region13: #{tpu_custom_call.1} parent=1 // pred_fallthru
      _
    // Predicated region
    $region14: #{tpu_custom_call.1} parent=1 // pred_check
      _
    $region15: #{tpu_custom_call.1} parent=1 // pred_check_branch
      %40 = sbr.rel (0) target = $region17
    $region16: #{tpu_custom_call.1} parent=1 // pred_region
      %s42 = ssub.s32 2048, 2048
      %43 = vsyncadd [#allocation6], %s42
      %s44 = sshll.u32 [#allocation7], 4
      %s45 = int_to_ptr.vmem [resolvable:$true] %s44
      %50 = dma.hbm_to_vmem [thread:$0]  %s3, 2048, %s45, [#allocation6], 128, 128, 8
    $region17: #{tpu_custom_call.1} parent=1 // pred_fallthru
      _
    // Predicated region
    $region18: #{tpu_custom_call.1} parent=1 // pred_check
      _
    $region19: #{tpu_custom_call.1} parent=1 // pred_check_branch
      %52 = sbr.rel (0) target = $region21
    $region20: #{tpu_custom_call.1} parent=1 // pred_region
      _
    $region21: #{tpu_custom_call.1} parent=1 // pred_fallthru
      _
    // Predicated region
    $region22: #{tpu_custom_call.1} parent=1 // pred_check
      _
    $region23: #{tpu_custom_call.1} parent=1 // pred_check_branch
      %54 = sbr.rel (0) target = $region25
    $region24: #{tpu_custom_call.1} parent=1 // pred_region
      %55 = dma.done [#allocation3], 256
    $region25: #{tpu_custom_call.1} parent=1 // pred_fallthru
      _
    // Predicated region
    $region26: #{tpu_custom_call.1} parent=1 // pred_check
      _
    $region27: #{tpu_custom_call.1} parent=1 // pred_check_branch
      %57 = sbr.rel (0) target = $region29
    $region28: #{tpu_custom_call.1} parent=1 // pred_region
      %58 = dma.done [#allocation6], 2048
    $region29: #{tpu_custom_call.1} parent=1 // pred_fallthru
      _
    // Predicated region
    $region30: #{tpu_custom_call.1} parent=1 // pred_check
      _
    $region31: #{tpu_custom_call.1} parent=1 // pred_check_branch
      %60 = sbr.rel (0) target = $region33
    $region32: #{tpu_custom_call.1} parent=1 // pred_region
      %61 = dma.done [#allocation6], 2048
    $region33: #{tpu_custom_call.1} parent=1 // pred_fallthru
      _
    %v62 = vld [vmem:[#allocation2] sm:$0xff]
    %v63 = vld [vmem:[#allocation2 + $0x8] sm:$0xff]
    %v64 = vld [vmem:[#allocation5] sm:$0xff]
    %v65 = vld [vmem:[#allocation5 + $0x8] sm:$0xff]
    %v66 = vld [vmem:[#allocation5 + $0x10] sm:$0xff]
    %v67 = vld [vmem:[#allocation5 + $0x18] sm:$0xff]
    %v68 = vld [vmem:[#allocation5 + $0x20] sm:$0xff]
    %v69 = vld [vmem:[#allocation5 + $0x28] sm:$0xff]
    %v70 = vld [vmem:[#allocation5 + $0x30] sm:$0xff]
    %v71 = vld [vmem:[#allocation5 + $0x38] sm:$0xff]
    %v72 = vld [vmem:[#allocation5 + $0x40] sm:$0xff]
    %v73 = vld [vmem:[#allocation5 + $0x48] sm:$0xff]
    %v74 = vld [vmem:[#allocation5 + $0x50] sm:$0xff]
    %v75 = vld [vmem:[#allocation5 + $0x58] sm:$0xff]
    %v76 = vld [vmem:[#allocation5 + $0x60] sm:$0xff]
    %v77 = vld [vmem:[#allocation5 + $0x68] sm:$0xff]
    %v78 = vld [vmem:[#allocation5 + $0x70] sm:$0xff]
    %v79 = vld [vmem:[#allocation5 + $0x78] sm:$0xff]
    %v80 = vld [vmem:[%s2] sm:$0x1]
    %v82 = vlaneseq
    %v83 = vshrl.u32 %v82, 7
    %v84 = vsub.s32 0, %v83
    %v85 = vrot.slane %v80, %v84
    %87 = vmatprep.subr.mxu0 0.0
    %88 = vmatpush1.msra.mxu0 %v79
    %89 = vmatprep.subr.mxu0 0.0
    %90 = vmatpush1.msra.mxu0 %v78
    %91 = vmatprep.subr.mxu0 0.0
    %92 = vmatpush1.msra.mxu0 %v77
    %93 = vmatprep.subr.mxu0 0.0
    %94 = vmatpush1.msra.mxu0 %v76
    %95 = vmatprep.subr.mxu0 0.0
    %96 = vmatpush1.msra.mxu0 %v75
    %97 = vmatprep.subr.mxu0 0.0
    %98 = vmatpush1.msra.mxu0 %v74
    %99 = vmatprep.subr.mxu0 0.0
    %100 = vmatpush1.msra.mxu0 %v73
    %101 = vmatprep.subr.mxu0 0.0
    %102 = vmatpush1.msra.mxu0 %v72
    %103 = vmatprep.subr.mxu0 0.0
    %104 = vmatpush1.msra.mxu0 %v71
    %105 = vmatprep.subr.mxu0 0.0
    %106 = vmatpush1.msra.mxu0 %v70
    %107 = vmatprep.subr.mxu0 0.0
    %108 = vmatpush1.msra.mxu0 %v69
    %109 = vmatprep.subr.mxu0 0.0
    %110 = vmatpush1.msra.mxu0 %v68
    %111 = vmatprep.subr.mxu0 0.0
    %112 = vmatpush1.msra.mxu0 %v67
    %113 = vmatprep.subr.mxu0 0.0
    %114 = vmatpush1.msra.mxu0 %v66
    %115 = vmatprep.subr.mxu0 0.0
    %116 = vmatpush1.msra.mxu0 %v65
    %117 = vmatprep.subr.mxu0 0.0
    %118 = vmatpush1.msra.mxu0 %v64
    %119 = vmatprep.subr.mxu0 0.0
    %120 = vmatpush2.msra.mxu0 0.0
    %121 = vmatprep.subr.mxu0 0.0
    %122 = vmatpush2.msra.mxu0 0.0
    %123 = vmatprep.subr.mxu0 0.0
    %124 = vmatpush2.msra.mxu0 0.0
    %125 = vmatprep.subr.mxu0 0.0
    %126 = vmatpush2.msra.mxu0 0.0
    %127 = vmatprep.subr.mxu0 0.0
    %128 = vmatpush2.msra.mxu0 0.0
    %129 = vmatprep.subr.mxu0 0.0
    %130 = vmatpush2.msra.mxu0 0.0
    %131 = vmatprep.subr.mxu0 0.0
    %132 = vmatpush2.msra.mxu0 0.0
    %133 = vmatprep.subr.mxu0 0.0
    %134 = vmatpush2.msra.mxu0 0.0
    %135 = vmatprep.subr.mxu0 0.0
    %136 = vmatpush2.msra.mxu0 0.0
    %137 = vmatprep.subr.mxu0 0.0
    %138 = vmatpush2.msra.mxu0 0.0
    %139 = vmatprep.subr.mxu0 0.0
    %140 = vmatpush2.msra.mxu0 0.0
    %141 = vmatprep.subr.mxu0 0.0
    %142 = vmatpush2.msra.mxu0 0.0
    %143 = vmatprep.subr.mxu0 0.0
    %144 = vmatpush2.msra.mxu0 0.0
    %145 = vmatprep.subr.mxu0 0.0
    %146 = vmatpush2.msra.mxu0 0.0
    %147 = vmatprep.subr.mxu0 0.0
    %148 = vmatpush2.msra.mxu0 0.0
    %149 = vmatprep.subr.mxu0 0.0
    %150 = vmatpush2.msra.mxu0 0.0
    %151 = vmatprep.mubr.f32.mxu0 0.0
    %152 = vmatmul.mubr.f32.gmra.mxu0 %v62
    %v153 = vpop.f32.mrf.mxu0
    %v154 = vadd.f32 %v85, %v153
    %v155 = vpop.f32.mrf.mxu0
    %156 = vmatprep.mubr.f32.mxu0 0.0
    %157 = vmatmul.mubr.f32.gmra.mxu0 %v63
    %v158 = vpop.f32.mrf.mxu0
    %v159 = vadd.f32 %v85, %v158
    %v160 = vpop.f32.mrf.mxu0
    %161 = vdwg.mxu0
    %v162 = vmul.f32 %v154, 0.5
    %v163 = vmul.f32 %v159, 0.5
    %v164 = vrcp.pop 1.4142135
    %v165 = vmul.f32 %v154, %v164
    %v166 = vmul.f32 %v159, %v164
    %v167 = verf.f32.pop %v165
    %v168 = verf.f32.pop %v166
    %v169 = vadd.f32 %v167, 1.0
    %v170 = vadd.f32 %v168, 1.0
    %v171 = vmul.f32 %v162, %v169
    %v172 = vmul.f32 %v163, %v170
    %v173 = vld [vmem:[#allocation7] sm:$0xff]
    %v174 = vld [vmem:[#allocation7 + $0x8] sm:$0xff]
    %v175 = vld [vmem:[#allocation7 + $0x10] sm:$0xff]
    %v176 = vld [vmem:[#allocation7 + $0x18] sm:$0xff]
    %v177 = vld [vmem:[#allocation7 + $0x20] sm:$0xff]
    %v178 = vld [vmem:[#allocation7 + $0x28] sm:$0xff]
    %v179 = vld [vmem:[#allocation7 + $0x30] sm:$0xff]
    %v180 = vld [vmem:[#allocation7 + $0x38] sm:$0xff]
    %v181 = vld [vmem:[#allocation7 + $0x40] sm:$0xff]
    %v182 = vld [vmem:[#allocation7 + $0x48] sm:$0xff]
    %v183 = vld [vmem:[#allocation7 + $0x50] sm:$0xff]
    %v184 = vld [vmem:[#allocation7 + $0x58] sm:$0xff]
    %v185 = vld [vmem:[#allocation7 + $0x60] sm:$0xff]
    %v186 = vld [vmem:[#allocation7 + $0x68] sm:$0xff]
    %v187 = vld [vmem:[#allocation7 + $0x70] sm:$0xff]
    %v188 = vld [vmem:[#allocation7 + $0x78] sm:$0xff]
    %v189 = vld [vmem:[%s4] sm:$0x1]
    %v191 = vlaneseq
    %v192 = vshrl.u32 %v191, 7
    %v193 = vsub.s32 0, %v192
    %v194 = vrot.slane %v189, %v193
    %196 = vmatprep.subr.mxu0 0.0
    %197 = vmatpush1.msra.mxu0 %v188
    %198 = vmatprep.subr.mxu0 0.0
    %199 = vmatpush1.msra.mxu0 %v187
    %200 = vmatprep.subr.mxu0 0.0
    %201 = vmatpush1.msra.mxu0 %v186
    %202 = vmatprep.subr.mxu0 0.0
    %203 = vmatpush1.msra.mxu0 %v185
    %204 = vmatprep.subr.mxu0 0.0
    %205 = vmatpush1.msra.mxu0 %v184
    %206 = vmatprep.subr.mxu0 0.0
    %207 = vmatpush1.msra.mxu0 %v183
    %208 = vmatprep.subr.mxu0 0.0
    %209 = vmatpush1.msra.mxu0 %v182
    %210 = vmatprep.subr.mxu0 0.0
    %211 = vmatpush1.msra.mxu0 %v181
    %212 = vmatprep.subr.mxu0 0.0
    %213 = vmatpush1.msra.mxu0 %v180
    %214 = vmatprep.subr.mxu0 0.0
    %215 = vmatpush1.msra.mxu0 %v179
    %216 = vmatprep.subr.mxu0 0.0
    %217 = vmatpush1.msra.mxu0 %v178
    %218 = vmatprep.subr.mxu0 0.0
    %219 = vmatpush1.msra.mxu0 %v177
    %220 = vmatprep.subr.mxu0 0.0
    %221 = vmatpush1.msra.mxu0 %v176
    %222 = vmatprep.subr.mxu0 0.0
    %223 = vmatpush1.msra.mxu0 %v175
    %224 = vmatprep.subr.mxu0 0.0
    %225 = vmatpush1.msra.mxu0 %v174
    %226 = vmatprep.subr.mxu0 0.0
    %227 = vmatpush1.msra.mxu0 %v173
    %228 = vmatprep.subr.mxu0 0.0
    %229 = vmatpush2.msra.mxu0 0.0
    %230 = vmatprep.subr.mxu0 0.0
    %231 = vmatpush2.msra.mxu0 0.0
    %232 = vmatprep.subr.mxu0 0.0
    %233 = vmatpush2.msra.mxu0 0.0
    %234 = vmatprep.subr.mxu0 0.0
    %235 = vmatpush2.msra.mxu0 0.0
    %236 = vmatprep.subr.mxu0 0.0
    %237 = vmatpush2.msra.mxu0 0.0
    %238 = vmatprep.subr.mxu0 0.0
    %239 = vmatpush2.msra.mxu0 0.0
    %240 = vmatprep.subr.mxu0 0.0
    %241 = vmatpush2.msra.mxu0 0.0
    %242 = vmatprep.subr.mxu0 0.0
    %243 = vmatpush2.msra.mxu0 0.0
    %244 = vmatprep.subr.mxu0 0.0
    %245 = vmatpush2.msra.mxu0 0.0
    %246 = vmatprep.subr.mxu0 0.0
    %247 = vmatpush2.msra.mxu0 0.0
    %248 = vmatprep.subr.mxu0 0.0
    %249 = vmatpush2.msra.mxu0 0.0
    %250 = vmatprep.subr.mxu0 0.0
    %251 = vmatpush2.msra.mxu0 0.0
    %252 = vmatprep.subr.mxu0 0.0
    %253 = vmatpush2.msra.mxu0 0.0
    %254 = vmatprep.subr.mxu0 0.0
    %255 = vmatpush2.msra.mxu0 0.0
    %256 = vmatprep.subr.mxu0 0.0
    %257 = vmatpush2.msra.mxu0 0.0
    %258 = vmatprep.subr.mxu0 0.0
    %259 = vmatpush2.msra.mxu0 0.0
    %260 = vmatprep.mubr.f32.mxu0 0.0
    %261 = vmatmul.mubr.f32.gmra.mxu0 %v171
    %v262 = vpop.f32.mrf.mxu0
    %v263 = vadd.f32 %v194, %v262
    %v264 = vpop.f32.mrf.mxu0
    %265 = vmatprep.mubr.f32.mxu0 0.0
    %266 = vmatmul.mubr.f32.gmra.mxu0 %v172
    %v267 = vpop.f32.mrf.mxu0
    %v268 = vadd.f32 %v194, %v267
    %v269 = vpop.f32.mrf.mxu0
    %270 = vdwg.mxu0
    %v271 = vadd.f32 %v62, %v263
    %v272 = vadd.f32 %v63, %v268
    %273 = vst [vmem:[#allocation8] sm:$0xff] %v271
    %274 = vst [vmem:[#allocation8 + $0x8] sm:$0xff] %v272
    // Predicated region
    $region34: #{tpu_custom_call.1} parent=1 // pred_check
      _
    $region35: #{tpu_custom_call.1} parent=1 // pred_check_branch
      %276 = sbr.rel (0) target = $region37
    $region36: #{tpu_custom_call.1} parent=1 // pred_region
      %s278 = ssub.s32 256, 256
      %279 = vsyncadd [#allocation4], %s278
      %s280 = sshll.u32 [#allocation8], 4
      %s281 = int_to_ptr.vmem [resolvable:$true] %s280
      %286 = dma.vmem_to_hbm [thread:$0]  %s281, 256, %s5, [#allocation4], 128, 128, 8
    $region37: #{tpu_custom_call.1} parent=1 // pred_fallthru
      _
    // Predicated region
    $region38: #{tpu_custom_call.1} parent=1 // pred_check
      _
    $region39: #{tpu_custom_call.1} parent=1 // pred_check_branch
      %288 = sbr.rel (0) target = $region41
    $region40: #{tpu_custom_call.1} parent=1 // pred_region
      %289 = dma.done [#allocation4], 256
    $region41: #{tpu_custom_call.1} parent=1 // pred_fallthru
      _
    %290 = vsyncpa [#allocation3], 1
    %291 = vsyncpa [#allocation6], 1
    %292 = vsyncpa [#allocation4], 1

// kernel: tpu_custom_call.1
$region0: #{tpu_custom_call.1}
  #allocation0 [shape = 'u32[]', space=smem, size = 0x4, offset = 0x4, fixed_abs, tag = 'smem constant byte address 0x4 - core index']
  #allocation1 [shape = 'u32[144,128]{1,0:T(1,128)}', space=vmem, size = 0x12000, scoped, tag = 'internal scratch']
  %s0 = inlined_call_operand.hbm [shape: f32[16,128], index: 0, kind: input, shape index: {}]
  %s1 = inlined_call_operand.hbm [shape: f32[128,128], index: 1, kind: input, shape index: {}]
  %s2 = inlined_call_operand.vmem [shape: f32[1,128], index: 2, kind: input, shape index: {}]
  %s3 = inlined_call_operand.hbm [shape: f32[128,128], index: 3, kind: input, shape index: {}]
  %s4 = inlined_call_operand.vmem [shape: f32[1,128], index: 4, kind: input, shape index: {}]
  %s5 = inlined_call_operand.hbm [shape: f32[16,128], index: 5, kind: output, shape index: {}]
  %s6 = sld [smem:[#allocation0]]
  $region42: #{tpu_custom_call.1} parent=0
    _
  %s8 = ssub.s32 1, %s6
  %s9 = scalar_select 0, %s8, %s6
  $region1: #{tpu_custom_call.1} parent=0
    #allocation2 [shape = 'u8[8192]{0}', space=vmem, size = 0x2000, scoped, tag = 'input window, operand 0, single buffered']
    #allocation3 [shape = 's32[1]{0}', space=sflag, size = 0x4, scoped, tag = 'scoped memory for tpu_custom_call.1']
    #allocation4 [shape = 's32[1]{0}', space=sflag, size = 0x4, scoped, tag = 'scoped memory for tpu_custom_call.1']
    #allocation5 [shape = 'u8[65536]{0}', space=vmem, size = 0x10000, scoped, tag = 'input window, operand 1, single buffered']
    #allocation6 [shape = 's32[1]{0}', space=sflag, size = 0x4, scoped, tag = 'scoped memory for tpu_custom_call.1']
    #allocation7 [shape = 'u8[65536]{0}', space=vmem, size = 0x10000, scoped, tag = 'input window, operand 3, single buffered']
    #allocation8 [shape = 'u8[8192]{0}', space=vmem, size = 0x2000, scoped, tag = 'output window, operand 0, single buffered']
    %10 = vsyncpa [#allocation3], 0
    %11 = vsyncpa [#allocation6], 0
    %12 = vsyncpa [#allocation4], 0
    // Predicated region
    $region2: #{tpu_custom_call.1} parent=1 // pred_check
      _
    $region3: #{tpu_custom_call.1} parent=1 // pred_check_branch
      %14 = sbr.rel (0) target = $region5
    $region4: #{tpu_custom_call.1} parent=1 // pred_region
      %s16 = ssub.s32 256, 256
      %17 = vsyncadd [#allocation3], %s16
      %s18 = sshll.u32 [#allocation2], 4
      %s19 = int_to_ptr.vmem [resolvable:$true] %s18
      %24 = dma.hbm_to_vmem [thread:$0]  %s0, 256, %s19, [#allocation3], 128, 128, 8
    $region5: #{tpu_custom_call.1} parent=1 // pred_fallthru
      _
    // Predicated region
    $region6: #{tpu_custom_call.1} parent=1 // pred_check
      _
    $region7: #{tpu_custom_call.1} parent=1 // pred_check_branch
      %26 = sbr.rel (0) target = $region9
    $region8: #{tpu_custom_call.1} parent=1 // pred_region
      %s28 = ssub.s32 2048, 2048
      %29 = vsyncadd [#allocation6], %s28
      %s30 = sshll.u32 [#allocation5], 4
      %s31 = int_to_ptr.vmem [resolvable:$true] %s30
      %36 = dma.hbm_to_vmem [thread:$0]  %s1, 2048, %s31, [#allocation6], 128, 128, 8
    $region9: #{tpu_custom_call.1} parent=1 // pred_fallthru
      _
    // Predicated region
    $region10: #{tpu_custom_call.1} parent=1 // pred_check
      _
    $region11: #{tpu_custom_call.1} parent=1 // pred_check_branch
      %38 = sbr.rel (0) target = $region13
    $region12: #{tpu_custom_call.1} parent=1 // pred_region
      _
    $region13: #{tpu_custom_call.1} parent=1 // pred_fallthru
      _
    // Predicated region
    $region14: #{tpu_custom_call.1} parent=1 // pred_check
      _
    $region15: #{tpu_custom_call.1} parent=1 // pred_check_branch
      %40 = sbr.rel (0) target = $region17
    $region16: #{tpu_custom_call.1} parent=1 // pred_region
      %s42 = ssub.s32 2048, 2048
      %43 = vsyncadd [#allocation6], %s42
      %s44 = sshll.u32 [#allocation7], 4
      %s45 = int_to_ptr.vmem [resolvable:$true] %s44
      %50 = dma.hbm_to_vmem [thread:$0]  %s3, 2048, %s45, [#allocation6], 128, 128, 8
    $region17: #{tpu_custom_call.1} parent=1 // pred_fallthru
      _
    // Predicated region
    $region18: #{tpu_custom_call.1} parent=1 // pred_check
      _
    $region19: #{tpu_custom_call.1} parent=1 // pred_check_branch
      %52 = sbr.rel (0) target = $region21
    $region20: #{tpu_custom_call.1} parent=1 // pred_region
      _
    $region21: #{tpu_custom_call.1} parent=1 // pred_fallthru
      _
    // Predicated region
    $region22: #{tpu_custom_call.1} parent=1 // pred_check
      _
    $region23: #{tpu_custom_call.1} parent=1 // pred_check_branch
      %54 = sbr.rel (0) target = $region25
    $region24: #{tpu_custom_call.1} parent=1 // pred_region
      %55 = dma.done [#allocation3], 256
    $region25: #{tpu_custom_call.1} parent=1 // pred_fallthru
      _
    // Predicated region
    $region26: #{tpu_custom_call.1} parent=1 // pred_check
      _
    $region27: #{tpu_custom_call.1} parent=1 // pred_check_branch
      %57 = sbr.rel (0) target = $region29
    $region28: #{tpu_custom_call.1} parent=1 // pred_region
      %58 = dma.done [#allocation6], 2048
    $region29: #{tpu_custom_call.1} parent=1 // pred_fallthru
      _
    // Predicated region
    $region30: #{tpu_custom_call.1} parent=1 // pred_check
      _
    $region31: #{tpu_custom_call.1} parent=1 // pred_check_branch
      %60 = sbr.rel (0) target = $region33
    $region32: #{tpu_custom_call.1} parent=1 // pred_region
      %61 = dma.done [#allocation6], 2048
    $region33: #{tpu_custom_call.1} parent=1 // pred_fallthru
      _
    %v62 = vld [vmem:[#allocation2] sm:$0xff]
    %v63 = vld [vmem:[#allocation2 + $0x8] sm:$0xff]
    %v64 = vld [vmem:[#allocation5] sm:$0xff]
    %v65 = vld [vmem:[#allocation5 + $0x8] sm:$0xff]
    %v66 = vld [vmem:[#allocation5 + $0x10] sm:$0xff]
    %v67 = vld [vmem:[#allocation5 + $0x18] sm:$0xff]
    %v68 = vld [vmem:[#allocation5 + $0x20] sm:$0xff]
    %v69 = vld [vmem:[#allocation5 + $0x28] sm:$0xff]
    %v70 = vld [vmem:[#allocation5 + $0x30] sm:$0xff]
    %v71 = vld [vmem:[#allocation5 + $0x38] sm:$0xff]
    %v72 = vld [vmem:[#allocation5 + $0x40] sm:$0xff]
    %v73 = vld [vmem:[#allocation5 + $0x48] sm:$0xff]
    %v74 = vld [vmem:[#allocation5 + $0x50] sm:$0xff]
    %v75 = vld [vmem:[#allocation5 + $0x58] sm:$0xff]
    %v76 = vld [vmem:[#allocation5 + $0x60] sm:$0xff]
    %v77 = vld [vmem:[#allocation5 + $0x68] sm:$0xff]
    %v78 = vld [vmem:[#allocation5 + $0x70] sm:$0xff]
    %v79 = vld [vmem:[#allocation5 + $0x78] sm:$0xff]
    %v80 = vld [vmem:[%s2] sm:$0x1]
    %v82 = vlaneseq
    %v83 = vshrl.u32 %v82, 7
    %v84 = vsub.s32 0, %v83
    %v85 = vrot.slane %v80, %v84
    %87 = vmatprep.subr.mxu0 0.0
    %88 = vmatpush1.msra.mxu0 %v79
    %89 = vmatprep.subr.mxu0 0.0
    %90 = vmatpush1.msra.mxu0 %v78
    %91 = vmatprep.subr.mxu0 0.0
    %92 = vmatpush1.msra.mxu0 %v77
    %93 = vmatprep.subr.mxu0 0.0
    %94 = vmatpush1.msra.mxu0 %v76
    %95 = vmatprep.subr.mxu0 0.0
    %96 = vmatpush1.msra.mxu0 %v75
    %97 = vmatprep.subr.mxu0 0.0
    %98 = vmatpush1.msra.mxu0 %v74
    %99 = vmatprep.subr.mxu0 0.0
    %100 = vmatpush1.msra.mxu0 %v73
    %101 = vmatprep.subr.mxu0 0.0
    %102 = vmatpush1.msra.mxu0 %v72
    %103 = vmatprep.subr.mxu0 0.0
    %104 = vmatpush1.msra.mxu0 %v71
    %105 = vmatprep.subr.mxu0 0.0
    %106 = vmatpush1.msra.mxu0 %v70
    %107 = vmatprep.subr.mxu0 0.0
    %108 = vmatpush1.msra.mxu0 %v69
    %109 = vmatprep.subr.mxu0 0.0
    %110 = vmatpush1.msra.mxu0 %v68
    %111 = vmatprep.subr.mxu0 0.0
    %112 = vmatpush1.msra.mxu0 %v67
    %113 = vmatprep.subr.mxu0 0.0
    %114 = vmatpush1.msra.mxu0 %v66
    %115 = vmatprep.subr.mxu0 0.0
    %116 = vmatpush1.msra.mxu0 %v65
    %117 = vmatprep.subr.mxu0 0.0
    %118 = vmatpush1.msra.mxu0 %v64
    %119 = vmatprep.subr.mxu0 0.0
    %120 = vmatpush2.msra.mxu0 0.0
    %121 = vmatprep.subr.mxu0 0.0
    %122 = vmatpush2.msra.mxu0 0.0
    %123 = vmatprep.subr.mxu0 0.0
    %124 = vmatpush2.msra.mxu0 0.0
    %125 = vmatprep.subr.mxu0 0.0
    %126 = vmatpush2.msra.mxu0 0.0
    %127 = vmatprep.subr.mxu0 0.0
    %128 = vmatpush2.msra.mxu0 0.0
    %129 = vmatprep.subr.mxu0 0.0
    %130 = vmatpush2.msra.mxu0 0.0
    %131 = vmatprep.subr.mxu0 0.0
    %132 = vmatpush2.msra.mxu0 0.0
    %133 = vmatprep.subr.mxu0 0.0
    %134 = vmatpush2.msra.mxu0 0.0
    %135 = vmatprep.subr.mxu0 0.0
    %136 = vmatpush2.msra.mxu0 0.0
    %137 = vmatprep.subr.mxu0 0.0
    %138 = vmatpush2.msra.mxu0 0.0
    %139 = vmatprep.subr.mxu0 0.0
    %140 = vmatpush2.msra.mxu0 0.0
    %141 = vmatprep.subr.mxu0 0.0
    %142 = vmatpush2.msra.mxu0 0.0
    %143 = vmatprep.subr.mxu0 0.0
    %144 = vmatpush2.msra.mxu0 0.0
    %145 = vmatprep.subr.mxu0 0.0
    %146 = vmatpush2.msra.mxu0 0.0
    %147 = vmatprep.subr.mxu0 0.0
    %148 = vmatpush2.msra.mxu0 0.0
    %149 = vmatprep.subr.mxu0 0.0
    %150 = vmatpush2.msra.mxu0 0.0
    %151 = vmatprep.mubr.f32.mxu0 0.0
    %152 = vmatmul.mubr.f32.gmra.mxu0 %v62
    %v153 = vpop.f32.mrf.mxu0
    %v154 = vadd.f32 %v85, %v153
    %v155 = vpop.f32.mrf.mxu0
    %156 = vmatprep.mubr.f32.mxu0 0.0
    %157 = vmatmul.mubr.f32.gmra.mxu0 %v63
    %v158 = vpop.f32.mrf.mxu0
    %v159 = vadd.f32 %v85, %v158
    %v160 = vpop.f32.mrf.mxu0
    %161 = vdwg.mxu0
    %v162 = vmul.f32 %v154, 0.5
    %v163 = vmul.f32 %v159, 0.5
    %v164 = vrcp.pop 1.4142135
    %v165 = vmul.f32 %v154, %v164
    %v166 = vmul.f32 %v159, %v164
    %v167 = verf.f32.pop %v165
    %v168 = verf.f32.pop %v166
    %v169 = vadd.f32 %v167, 1.0
    %v170 = vadd.f32 %v168, 1.0
    %v171 = vmul.f32 %v162, %v169
    %v172 = vmul.f32 %v163, %v170
    %v173 = vld [vmem:[#allocation7] sm:$0xff]
    %v174 = vld [vmem:[#allocation7 + $0x8] sm:$0xff]
    %v175 = vld [vmem:[#allocation7 + $0x10] sm:$0xff]
    %v176 = vld [vmem:[#allocation7 + $0x18] sm:$0xff]
    %v177 = vld [vmem:[#allocation7 + $0x20] sm:$0xff]
    %v178 = vld [vmem:[#allocation7 + $0x28] sm:$0xff]
    %v179 = vld [vmem:[#allocation7 + $0x30] sm:$0xff]
    %v180 = vld [vmem:[#allocation7 + $0x38] sm:$0xff]
    %v181 = vld [vmem:[#allocation7 + $0x40] sm:$0xff]
    %v182 = vld [vmem:[#allocation7 + $0x48] sm:$0xff]
    %v183 = vld [vmem:[#allocation7 + $0x50] sm:$0xff]
    %v184 = vld [vmem:[#allocation7 + $0x58] sm:$0xff]
    %v185 = vld [vmem:[#allocation7 + $0x60] sm:$0xff]
    %v186 = vld [vmem:[#allocation7 + $0x68] sm:$0xff]
    %v187 = vld [vmem:[#allocation7 + $0x70] sm:$0xff]
    %v188 = vld [vmem:[#allocation7 + $0x78] sm:$0xff]
    %v189 = vld [vmem:[%s4] sm:$0x1]
    %v191 = vlaneseq
    %v192 = vshrl.u32 %v191, 7
    %v193 = vsub.s32 0, %v192
    %v194 = vrot.slane %v189, %v193
    %196 = vmatprep.subr.mxu0 0.0
    %197 = vmatpush1.msra.mxu0 %v188
    %198 = vmatprep.subr.mxu0 0.0
    %199 = vmatpush1.msra.mxu0 %v187
    %200 = vmatprep.subr.mxu0 0.0
    %201 = vmatpush1.msra.mxu0 %v186
    %202 = vmatprep.subr.mxu0 0.0
    %203 = vmatpush1.msra.mxu0 %v185
    %204 = vmatprep.subr.mxu0 0.0
    %205 = vmatpush1.msra.mxu0 %v184
    %206 = vmatprep.subr.mxu0 0.0
    %207 = vmatpush1.msra.mxu0 %v183
    %208 = vmatprep.subr.mxu0 0.0
    %209 = vmatpush1.msra.mxu0 %v182
    %210 = vmatprep.subr.mxu0 0.0
    %211 = vmatpush1.msra.mxu0 %v181
    %212 = vmatprep.subr.mxu0 0.0
    %213 = vmatpush1.msra.mxu0 %v180
    %214 = vmatprep.subr.mxu0 0.0
    %215 = vmatpush1.msra.mxu0 %v179
    %216 = vmatprep.subr.mxu0 0.0
    %217 = vmatpush1.msra.mxu0 %v178
    %218 = vmatprep.subr.mxu0 0.0
    %219 = vmatpush1.msra.mxu0 %v177
    %220 = vmatprep.subr.mxu0 0.0
    %221 = vmatpush1.msra.mxu0 %v176
    %222 = vmatprep.subr.mxu0 0.0
    %223 = vmatpush1.msra.mxu0 %v175
    %224 = vmatprep.subr.mxu0 0.0
    %225 = vmatpush1.msra.mxu0 %v174
    %226 = vmatprep.subr.mxu0 0.0
    %227 = vmatpush1.msra.mxu0 %v173
    %228 = vmatprep.subr.mxu0 0.0
    %229 = vmatpush2.msra.mxu0 0.0
    %230 = vmatprep.subr.mxu0 0.0
    %231 = vmatpush2.msra.mxu0 0.0
    %232 = vmatprep.subr.mxu0 0.0
    %233 = vmatpush2.msra.mxu0 0.0
    %234 = vmatprep.subr.mxu0 0.0
    %235 = vmatpush2.msra.mxu0 0.0
    %236 = vmatprep.subr.mxu0 0.0
    %237 = vmatpush2.msra.mxu0 0.0
    %238 = vmatprep.subr.mxu0 0.0
    %239 = vmatpush2.msra.mxu0 0.0
    %240 = vmatprep.subr.mxu0 0.0
    %241 = vmatpush2.msra.mxu0 0.0
    %242 = vmatprep.subr.mxu0 0.0
    %243 = vmatpush2.msra.mxu0 0.0
    %244 = vmatprep.subr.mxu0 0.0
    %245 = vmatpush2.msra.mxu0 0.0
    %246 = vmatprep.subr.mxu0 0.0
    %247 = vmatpush2.msra.mxu0 0.0
    %248 = vmatprep.subr.mxu0 0.0
    %249 = vmatpush2.msra.mxu0 0.0
    %250 = vmatprep.subr.mxu0 0.0
    %251 = vmatpush2.msra.mxu0 0.0
    %252 = vmatprep.subr.mxu0 0.0
    %253 = vmatpush2.msra.mxu0 0.0
    %254 = vmatprep.subr.mxu0 0.0
    %255 = vmatpush2.msra.mxu0 0.0
    %256 = vmatprep.subr.mxu0 0.0
    %257 = vmatpush2.msra.mxu0 0.0
    %258 = vmatprep.subr.mxu0 0.0
    %259 = vmatpush2.msra.mxu0 0.0
    %260 = vmatprep.mubr.f32.mxu0 0.0
    %261 = vmatmul.mubr.f32.gmra.mxu0 %v171
    %v262 = vpop.f32.mrf.mxu0
    %v263 = vadd.f32 %v194, %v262
    %v264 = vpop.f32.mrf.mxu0
    %265 = vmatprep.mubr.f32.mxu0 0.0
    %266 = vmatmul.mubr.f32.gmra.mxu0 %v172
    %v267 = vpop.f32.mrf.mxu0
    %v268 = vadd.f32 %v194, %v267
    %v269 = vpop.f32.mrf.mxu0
    %270 = vdwg.mxu0
    %v271 = vadd.f32 %v62, %v263
    %v272 = vadd.f32 %v63, %v268
    %273 = vst [vmem:[#allocation8] sm:$0xff] %v271
    %274 = vst [vmem:[#allocation8 + $0x8] sm:$0xff] %v272
    // Predicated region
    $region34: #{tpu_custom_call.1} parent=1 // pred_check
      _
    $region35: #{tpu_custom_call.1} parent=1 // pred_check_branch
      %276 = sbr.rel (0) target = $region37
    $region36: #{tpu_custom_call.1} parent=1 // pred_region
      %s278 = ssub.s32 256, 256
      %279 = vsyncadd [#allocation4], %s278
      %s280 = sshll.u32 [#allocation8], 4
      %s281 = int_to_ptr.vmem [resolvable:$true] %s280
      %286 = dma.vmem_to_hbm [thread:$0]  %s281, 256, %s5, [#allocation4], 128, 128, 8
    $region37: #{tpu_custom_call.1} parent=1 // pred_fallthru
      _
    // Predicated region
    $region38: #{tpu_custom_call.1} parent=1 // pred_check
      _
    $region39: #{tpu_custom_call.1} parent=1 // pred_check_branch
      %288 = sbr.rel (0) target = $region41
    $region40: #{tpu_custom_call.1} parent=1 // pred_region
      %289 = dma.done [#allocation4], 256
    $region41: #{tpu_custom_call.1} parent=1 // pred_fallthru
      _
    %290 = vsyncpa [#allocation3], 1
    %291 = vsyncpa [#allocation6], 1
    %292 = vsyncpa [#allocation4], 1

</llo_original>
